<compile_context>
chip_gen: v7x
topology: tpu7x:2x2x1
jax: 0.10.0
libtpu: 0.0.40
codegen_flags: <defaults>
</compile_context>

<pallas_src>
import jax
import jax.numpy as jnp
from jax.experimental import pallas as pl
from jax.experimental.pallas import tpu as pltpu


def _mlp_logsoftmax_kernel(x_ref, w1_ref, b1_ref, w2t_ref, b2_ref, out_ref):
    # ---- Layer 1: Linear(V -> H) + ReLU (MXU, f32 accumulation) ----------
    x = x_ref[...]
    h = jnp.dot(x, w1_ref[...], preferred_element_type=jnp.float32) + b1_ref[...]
    h = jnp.maximum(h, 0.0)

    # ---- Layer 2: Linear(H -> 2) on the VPU -------------------------------
    # A 10x2 matmul uses <0.01% of an MXU pass but still pays full push/pop
    # latency; do it as two broadcast-multiplies + lane reductions instead.
    w2t = w2t_ref[...]                               # (2, H), pre-transposed in wrapper
    b2 = b2_ref[...]                                 # (1, 2)
    l0 = jnp.sum(h * w2t[0:1, :], axis=1, keepdims=True) + b2[:, 0:1]
    l1 = jnp.sum(h * w2t[1:2, :], axis=1, keepdims=True) + b2[:, 1:2]

    # ---- 2-class log-softmax closed form ----------------------------------
    # log_softmax([l0, l1]) = [-softplus(l1 - l0), -softplus(l0 - l1)]
    # computed with a numerically-stable softplus (no cross-lane max/sum).
    d = l1 - l0
    t = jnp.log(1.0 + jnp.exp(-jnp.abs(d)))          # softplus(-|d|)
    out0 = -(jnp.maximum(d, 0.0) + t)                # = -softplus(d)
    out1 = -(jnp.maximum(-d, 0.0) + t)               # = -softplus(-d)
    out_ref[...] = jnp.concatenate([out0, out1], axis=1).astype(out_ref.dtype)


def torch_model_forward(x, w1, b1, w2, b2, *, block_b=256):
    """Forward pass of TorchModel (inference, y=None).

    x:  [B, V] f32;  w1: [V, 10];  b1: [1, 10];  w2: [10, 2];  b2: [1, 2]
    returns log-probabilities [B, 2].
    """
    B, V = x.shape
    H = w1.shape[1]
    out_dim = w2.shape[1]

    # Batch tile: multiple of 8 sublanes, capped at the batch size.
    # (For v7x budget against 64 MiB VMEM; at these V the default is ample.)
    tb = max(8, min(block_b, B))
    tb = (tb // 8) * 8
    b_pad = ((B + tb - 1) // tb) * tb
    if b_pad != B:
        x = jnp.pad(x, ((0, b_pad - B), (0, 0)))

    # Hand the tiny second-layer weight to the kernel pre-transposed so no
    # in-kernel transpose is needed (constant, one-off XLA op).
    w2t = w2.T                                       # (2, H)

    out = pl.pallas_call(
        _mlp_logsoftmax_kernel,
        out_shape=jax.ShapeDtypeStruct((b_pad, out_dim), jnp.float32),
        grid_spec=pltpu.PrefetchScalarGridSpec(
            num_scalar_prefetch=0,
            grid=(b_pad // tb,),
            in_specs=[
                pl.BlockSpec((tb, V), lambda i: (i, 0)),        # x: tiled over batch
                pl.BlockSpec((V, H), lambda i: (0, 0)),         # w1: VMEM-resident
                pl.BlockSpec((1, H), lambda i: (0, 0)),         # b1: VMEM-resident
                pl.BlockSpec((out_dim, H), lambda i: (0, 0)),   # w2^T: VMEM-resident
                pl.BlockSpec((1, out_dim), lambda i: (0, 0)),   # b2: VMEM-resident
            ],
            out_specs=pl.BlockSpec((tb, out_dim), lambda i: (i, 0)),
        ),
        compiler_params=pltpu.CompilerParams(
            # Batch tiles are independent -> shard across both TCs on v7x.
            dimension_semantics=("parallel",),
        ),
    )(x, w1, b1, w2t, b2)
    return out[:B]


if __name__ == "__main__":
    # Small synthetic config: vocabulary size (len(diction)) = 32.
    VOCAB = 32
    HIDDEN = 10
    OUT = 2
    BATCH = 50  # deliberately not a multiple of the tile to exercise pad/slice

    key = jax.random.PRNGKey(0)
    k_x, k_w1, k_b1, k_w2, k_b2 = jax.random.split(key, 5)

    x = jax.random.normal(k_x, (BATCH, VOCAB), dtype=jnp.float32)
    w1 = jax.random.normal(k_w1, (VOCAB, HIDDEN), dtype=jnp.float32) * 0.1
    b1 = jax.random.normal(k_b1, (1, HIDDEN), dtype=jnp.float32) * 0.1
    w2 = jax.random.normal(k_w2, (HIDDEN, OUT), dtype=jnp.float32) * 0.1
    b2 = jax.random.normal(k_b2, (1, OUT), dtype=jnp.float32) * 0.1

    # Small block_b so this toy batch actually runs a multi-step grid
    # (50 pads to 64 rows -> grid=(4,)); real workloads would use 256-1024.
    y_pred = torch_model_forward(x, w1, b1, w2, b2, block_b=16)
    jax.block_until_ready(y_pred)

    # Sanity check against a pure-JAX reference of the same forward pass.
    h_ref = jnp.maximum(x @ w1 + b1, 0.0)
    logits_ref = h_ref @ w2 + b2
    ref = jax.nn.log_softmax(logits_ref, axis=1)
    assert y_pred.shape == (BATCH, OUT)
    assert jnp.allclose(y_pred, ref, atol=1e-5, rtol=1e-5)

    print("KERNEL_OK")
</pallas_src>

<mosaic_0001>
module attributes {stable_mosaic.version = 11 : i64} {
  func.func @_mlp_logsoftmax_kernel(%arg0: i32, %arg1: memref<16x32xf32, #tpu.memory_space<vmem>>, %arg2: memref<32x10xf32, #tpu.memory_space<vmem>>, %arg3: memref<1x10xf32, #tpu.memory_space<vmem>>, %arg4: memref<2x10xf32, #tpu.memory_space<vmem>>, %arg5: memref<1x2xf32, #tpu.memory_space<vmem>>, %arg6: memref<16x2xf32, #tpu.memory_space<vmem>>) attributes {dimension_semantics = [#tpu.dimension_semantics<parallel>], iteration_bounds = array<i64: 4>, scalar_prefetch = 0 : i64, scratch_operands = 0 : i64, tpu.core_type = #tpu.core_type<tc>, window_params = [{transform_indices = @transform_0, window_bounds = array<i64: 16, 32>}, {pipeline_mode = #tpu.pipeline_mode<synchronous>, transform_indices = @transform_1, window_bounds = array<i64: 32, 10>}, {pipeline_mode = #tpu.pipeline_mode<synchronous>, transform_indices = @transform_2, window_bounds = array<i64: 1, 10>}, {pipeline_mode = #tpu.pipeline_mode<synchronous>, transform_indices = @transform_3, window_bounds = array<i64: 2, 10>}, {pipeline_mode = #tpu.pipeline_mode<synchronous>, transform_indices = @transform_4, window_bounds = array<i64: 1, 2>}, {transform_indices = @transform_5, window_bounds = array<i64: 16, 2>}]} {
    %c0 = arith.constant 0 : index
    %c0_0 = arith.constant 0 : index
    %0 = vector.load %arg1[%c0, %c0_0] : memref<16x32xf32, #tpu.memory_space<vmem>>, vector<16x32xf32>
    %c0_1 = arith.constant 0 : index
    %c0_2 = arith.constant 0 : index
    %1 = vector.load %arg2[%c0_1, %c0_2] : memref<32x10xf32, #tpu.memory_space<vmem>>, vector<32x10xf32>
    %cst = arith.constant dense<0.000000e+00> : vector<16x10xf32>
    %2 = tpu.matmul %0, %1, %cst {dimension_numbers = #tpu.dot_dimension_numbers<[1], [0], [0], [1], [0, 0, 1, 1], [], []>} : vector<16x32xf32>, vector<32x10xf32>, vector<16x10xf32> -> vector<16x10xf32>
    %c0_3 = arith.constant 0 : index
    %c0_4 = arith.constant 0 : index
    %3 = vector.load %arg3[%c0_3, %c0_4] : memref<1x10xf32, #tpu.memory_space<vmem>>, vector<1x10xf32>
    %4 = vector.broadcast %3 : vector<1x10xf32> to vector<16x10xf32>
    %5 = arith.addf %2, %4 : vector<16x10xf32>
    %cst_5 = arith.constant 0.000000e+00 : f32
    %6 = vector.broadcast %cst_5 : f32 to vector<16x10xf32>
    %7 = arith.maximumf %5, %6 : vector<16x10xf32>
    %c0_6 = arith.constant 0 : index
    %c0_7 = arith.constant 0 : index
    %8 = vector.load %arg4[%c0_6, %c0_7] : memref<2x10xf32, #tpu.memory_space<vmem>>, vector<2x10xf32>
    %c0_8 = arith.constant 0 : index
    %c0_9 = arith.constant 0 : index
    %9 = vector.load %arg5[%c0_8, %c0_9] : memref<1x2xf32, #tpu.memory_space<vmem>>, vector<1x2xf32>
    %10 = vector.extract_strided_slice %8 {offsets = [0, 0], sizes = [1, 10], strides = [1, 1]} : vector<2x10xf32> to vector<1x10xf32>
    %11 = vector.broadcast %10 : vector<1x10xf32> to vector<16x10xf32>
    %12 = arith.mulf %7, %11 : vector<16x10xf32>
    %cst_10 = arith.constant dense<0.000000e+00> : vector<16xf32>
    %13 = vector.multi_reduction <add>, %12, %cst_10 [1] : vector<16x10xf32> to vector<16xf32>
    %14 = vector.shape_cast %13 : vector<16xf32> to vector<16x1xf32>
    %15 = vector.extract_strided_slice %9 {offsets = [0, 0], sizes = [1, 1], strides = [1, 1]} : vector<1x2xf32> to vector<1x1xf32>
    %16 = vector.broadcast %15 : vector<1x1xf32> to vector<16x1xf32>
    %17 = arith.addf %14, %16 : vector<16x1xf32>
    %18 = vector.extract_strided_slice %8 {offsets = [1, 0], sizes = [1, 10], strides = [1, 1]} : vector<2x10xf32> to vector<1x10xf32>
    %19 = vector.broadcast %18 : vector<1x10xf32> to vector<16x10xf32>
    %20 = arith.mulf %7, %19 : vector<16x10xf32>
    %cst_11 = arith.constant dense<0.000000e+00> : vector<16xf32>
    %21 = vector.multi_reduction <add>, %20, %cst_11 [1] : vector<16x10xf32> to vector<16xf32>
    %22 = vector.shape_cast %21 : vector<16xf32> to vector<16x1xf32>
    %23 = vector.extract_strided_slice %9 {offsets = [0, 1], sizes = [1, 1], strides = [1, 1]} : vector<1x2xf32> to vector<1x1xf32>
    %24 = vector.broadcast %23 : vector<1x1xf32> to vector<16x1xf32>
    %25 = arith.addf %22, %24 : vector<16x1xf32>
    %26 = arith.subf %25, %17 : vector<16x1xf32>
    %27 = math.absf %26 : vector<16x1xf32>
    %cst_12 = arith.constant 0.000000e+00 : f32
    %28 = vector.broadcast %cst_12 : f32 to vector<16x1xf32>
    %29 = arith.subf %28, %27 : vector<16x1xf32>
    %30 = math.exp %29 : vector<16x1xf32>
    %cst_13 = arith.constant 1.000000e+00 : f32
    %31 = vector.broadcast %cst_13 : f32 to vector<16x1xf32>
    %32 = arith.addf %31, %30 : vector<16x1xf32>
    %33 = math.log %32 : vector<16x1xf32>
    %cst_14 = arith.constant 0.000000e+00 : f32
    %34 = vector.broadcast %cst_14 : f32 to vector<16x1xf32>
    %35 = arith.maximumf %26, %34 : vector<16x1xf32>
    %36 = arith.addf %35, %33 : vector<16x1xf32>
    %cst_15 = arith.constant 0.000000e+00 : f32
    %37 = vector.broadcast %cst_15 : f32 to vector<16x1xf32>
    %38 = arith.subf %37, %36 : vector<16x1xf32>
    %cst_16 = arith.constant 0.000000e+00 : f32
    %39 = vector.broadcast %cst_16 : f32 to vector<16x1xf32>
    %40 = arith.subf %39, %26 : vector<16x1xf32>
    %cst_17 = arith.constant 0.000000e+00 : f32
    %41 = vector.broadcast %cst_17 : f32 to vector<16x1xf32>
    %42 = arith.maximumf %40, %41 : vector<16x1xf32>
    %43 = arith.addf %42, %33 : vector<16x1xf32>
    %cst_18 = arith.constant 0.000000e+00 : f32
    %44 = vector.broadcast %cst_18 : f32 to vector<16x1xf32>
    %45 = arith.subf %44, %43 : vector<16x1xf32>
    %46 = tpu.concatenate %38, %45 in 1 : vector<16x1xf32>, vector<16x1xf32> -> vector<16x2xf32>
    %c0_19 = arith.constant 0 : index
    %c0_20 = arith.constant 0 : index
    %47 = vector.load %arg6[%c0_19, %c0_20] : memref<16x2xf32, #tpu.memory_space<vmem>>, vector<16x2xf32>
    tpu.vector_store %arg6[%c0_19, %c0_20], %46 {strides = array<i32>} : memref<16x2xf32, #tpu.memory_space<vmem>>, vector<16x2xf32>,
    return
  }
  func.func @transform_0(%arg0: i32) -> (i32, i32) {
    %c0_i32 = arith.constant 0 : i32
    %c0_i32_0 = arith.constant 0 : i32
    return %arg0, %c0_i32 : i32, i32
  }
  func.func @transform_1(%arg0: i32) -> (i32, i32) {
    %c0_i32 = arith.constant 0 : i32
    %c0_i32_0 = arith.constant 0 : i32
    %c0_i32_1 = arith.constant 0 : i32
    return %c0_i32, %c0_i32_0 : i32, i32
  }
  func.func @transform_2(%arg0: i32) -> (i32, i32) {
    %c0_i32 = arith.constant 0 : i32
    %c0_i32_0 = arith.constant 0 : i32
    %c0_i32_1 = arith.constant 0 : i32
    return %c0_i32, %c0_i32_0 : i32, i32
  }
  func.func @transform_3(%arg0: i32) -> (i32, i32) {
    %c0_i32 = arith.constant 0 : i32
    %c0_i32_0 = arith.constant 0 : i32
    %c0_i32_1 = arith.constant 0 : i32
    return %c0_i32, %c0_i32_0 : i32, i32
  }
  func.func @transform_4(%arg0: i32) -> (i32, i32) {
    %c0_i32 = arith.constant 0 : i32
    %c0_i32_0 = arith.constant 0 : i32
    %c0_i32_1 = arith.constant 0 : i32
    return %c0_i32, %c0_i32_0 : i32, i32
  }
  func.func @transform_5(%arg0: i32) -> (i32, i32) {
    %c0_i32 = arith.constant 0 : i32
    %c0_i32_0 = arith.constant 0 : i32
    return %arg0, %c0_i32 : i32, i32
  }
}

</mosaic_0001>

<llo_original>
// kernel: tpu_custom_call.1
$region0: #{tpu_custom_call.1}
  #allocation0 [shape = 'u32[]', space=smem, size = 0x4, offset = 0x4, fixed_abs, tag = 'smem constant byte address 0x4 - core index']
  #allocation1 [shape = 'u32[144,128]{1,0:T(1,128)}', space=vmem, size = 0x12000, scoped, tag = 'internal scratch']
  %s0 = inlined_call_operand.vmem [shape: f32[64,32], index: 0, kind: input, shape index: {}]
  %s1 = inlined_call_operand.vmem [shape: f32[32,10], index: 1, kind: input, shape index: {}]
  %s2 = inlined_call_operand.vmem [shape: f32[1,10], index: 2, kind: input, shape index: {}]
  %s3 = inlined_call_operand.vmem [shape: f32[2,10], index: 3, kind: input, shape index: {}]
  %s4 = inlined_call_operand.vmem [shape: f32[1,2], index: 4, kind: input, shape index: {}]
  %s5 = inlined_call_operand.vmem [shape: f32[64,2], index: 5, kind: output, shape index: {}]
  %s6 = sld [smem:[#allocation0]]
  $region53: #{tpu_custom_call.1} parent=0
    _
  %s8 = ssub.s32 1, %s6
  %s9 = scalar_select 0, %s8, %s6
  loop: start=0, step=1, limit=6
  $region2: #{tpu_custom_call.1} parent=0 // loop_pre_header
    _
  $region3: #{tpu_custom_call.1} parent=0 // loop_header
    %s11 = sphi 0, %s15
    %p12 = scmp.ge.s32.totalorder %s11, 6
    %s21 = sphi 0, %s23
    %s24 = sphi 0, %s21
    %s25 = sphi 0, %s24
    %s41 = sphi 0, %s25
    %s45 = sphi 0, %s45
    %s47 = sphi 0, %s45
    %s48 = sphi 0, %s47
    %s62 = sphi 0, %s48
    %s66 = sphi 0, %s66
    %s68 = sphi 0, %s66
    %s69 = sphi 0, %s68
    %s83 = sphi 0, %s69
    %s87 = sphi 0, %s87
    %s89 = sphi 0, %s87
    %s90 = sphi 0, %s89
    %s104 = sphi 0, %s90
    %s108 = sphi 0, %s108
    %s110 = sphi 0, %s108
    %s111 = sphi 0, %s110
    %s125 = sphi 0, %s111
    %s131 = sphi 0, %s133
    %s134 = sphi 0, %s131
    %s135 = sphi 0, %s134
    %s151 = sphi 0, %s135
  $region4: #{tpu_custom_call.1} parent=0 // loop_header_branch
    %14 = sbr.rel (%p12) target = $region8
  $region5: #{tpu_custom_call.1} parent=0 // loop_body
    %s16 = ssub.s32 %s11, 1
    %s17 = ssub.s32 %s11, 2
    %s18 = sadd.s32 %s11, 1
    %s19 = ssub.s32 %s11, %s18
    %p20 = scmp.eq.s32.totalorder %s19, 0
    %s22 = sadd.s32 %s21, 1
    %s23 = scalar_select %p20, %s21, %s22
    %p26 = pneg %p20
    %p27 = scmp.eq.s32.totalorder %s11, 3
    %p28 = por %p26, %p27
    %p29 = scmp.ne.s32.totalorder %s21, %s24
    %p30 = scmp.eq.s32.totalorder %s11, 0
    %p31 = por %p29, %p30
    %p32 = scmp.ne.s32.totalorder %s21, %s24
    %p33 = scmp.eq.s32.totalorder %s16, 3
    %p34 = por %p32, %p33
    %p35 = scmp.ne.s32.totalorder %s24, %s25
    %p36 = scmp.eq.s32.totalorder %s16, 0
    %p37 = por %p35, %p36
    %p38 = scmp.ne.s32.totalorder %s24, %s25
    %p39 = scmp.eq.s32.totalorder %s17, 3
    %p40 = por %p38, %p39
    %p42 = scmp.ne.s32.totalorder %s25, %s41
    %p43 = scmp.eq.s32.totalorder %s17, 0
    %p44 = por %p42, %p43
    %s46 = sadd.s32 %s45, 1
    %p49 = scmp.eq.s32.totalorder %s11, 3
    %p50 = scmp.ne.s32.totalorder %s45, %s47
    %p51 = scmp.eq.s32.totalorder %s11, 0
    %p52 = por %p50, %p51
    %p53 = scmp.ne.s32.totalorder %s45, %s47
    %p54 = scmp.eq.s32.totalorder %s16, 3
    %p55 = por %p53, %p54
    %p56 = scmp.ne.s32.totalorder %s47, %s48
    %p57 = scmp.eq.s32.totalorder %s16, 0
    %p58 = por %p56, %p57
    %p59 = scmp.ne.s32.totalorder %s47, %s48
    %p60 = scmp.eq.s32.totalorder %s17, 3
    %p61 = por %p59, %p60
    %p63 = scmp.ne.s32.totalorder %s48, %s62
    %p64 = scmp.eq.s32.totalorder %s17, 0
    %p65 = por %p63, %p64
    %s67 = sadd.s32 %s66, 1
    %p70 = scmp.eq.s32.totalorder %s11, 3
    %p71 = scmp.ne.s32.totalorder %s66, %s68
    %p72 = scmp.eq.s32.totalorder %s11, 0
    %p73 = por %p71, %p72
    %p74 = scmp.ne.s32.totalorder %s66, %s68
    %p75 = scmp.eq.s32.totalorder %s16, 3
    %p76 = por %p74, %p75
    %p77 = scmp.ne.s32.totalorder %s68, %s69
    %p78 = scmp.eq.s32.totalorder %s16, 0
    %p79 = por %p77, %p78
    %p80 = scmp.ne.s32.totalorder %s68, %s69
    %p81 = scmp.eq.s32.totalorder %s17, 3
    %p82 = por %p80, %p81
    %p84 = scmp.ne.s32.totalorder %s69, %s83
    %p85 = scmp.eq.s32.totalorder %s17, 0
    %p86 = por %p84, %p85
    %s88 = sadd.s32 %s87, 1
    %p91 = scmp.eq.s32.totalorder %s11, 3
    %p92 = scmp.ne.s32.totalorder %s87, %s89
    %p93 = scmp.eq.s32.totalorder %s11, 0
    %p94 = por %p92, %p93
    %p95 = scmp.ne.s32.totalorder %s87, %s89
    %p96 = scmp.eq.s32.totalorder %s16, 3
    %p97 = por %p95, %p96
    %p98 = scmp.ne.s32.totalorder %s89, %s90
    %p99 = scmp.eq.s32.totalorder %s16, 0
    %p100 = por %p98, %p99
    %p101 = scmp.ne.s32.totalorder %s89, %s90
    %p102 = scmp.eq.s32.totalorder %s17, 3
    %p103 = por %p101, %p102
    %p105 = scmp.ne.s32.totalorder %s90, %s104
    %p106 = scmp.eq.s32.totalorder %s17, 0
    %p107 = por %p105, %p106
    %s109 = sadd.s32 %s108, 1
    %p112 = scmp.eq.s32.totalorder %s11, 3
    %p113 = scmp.ne.s32.totalorder %s108, %s110
    %p114 = scmp.eq.s32.totalorder %s11, 0
    %p115 = por %p113, %p114
    %p116 = scmp.ne.s32.totalorder %s108, %s110
    %p117 = scmp.eq.s32.totalorder %s16, 3
    %p118 = por %p116, %p117
    %p119 = scmp.ne.s32.totalorder %s110, %s111
    %p120 = scmp.eq.s32.totalorder %s16, 0
    %p121 = por %p119, %p120
    %p122 = scmp.ne.s32.totalorder %s110, %s111
    %p123 = scmp.eq.s32.totalorder %s17, 3
    %p124 = por %p122, %p123
    %p126 = scmp.ne.s32.totalorder %s111, %s125
    %p127 = scmp.eq.s32.totalorder %s17, 0
    %p128 = por %p126, %p127
    %s129 = ssub.s32 %s11, %s18
    %p130 = scmp.eq.s32.totalorder %s129, 0
    %s132 = sadd.s32 %s131, 1
    %s133 = scalar_select %p130, %s131, %s132
    %p136 = pneg %p130
    %p137 = scmp.eq.s32.totalorder %s11, 3
    %p138 = por %p136, %p137
    %p139 = scmp.ne.s32.totalorder %s131, %s134
    %p140 = scmp.eq.s32.totalorder %s11, 0
    %p141 = por %p139, %p140
    %p142 = scmp.ne.s32.totalorder %s131, %s134
    %p143 = scmp.eq.s32.totalorder %s16, 3
    %p144 = por %p142, %p143
    %p145 = scmp.ne.s32.totalorder %s134, %s135
    %p146 = scmp.eq.s32.totalorder %s16, 0
    %p147 = por %p145, %p146
    %p148 = scmp.ne.s32.totalorder %s134, %s135
    %p149 = scmp.eq.s32.totalorder %s17, 3
    %p150 = por %p148, %p149
    %p152 = scmp.ne.s32.totalorder %s135, %s151
    %p153 = scmp.eq.s32.totalorder %s17, 0
    %p154 = por %p152, %p153
    %p155 = scmp.le.s32.totalorder 1, %s11
    %p156 = scmp.lt.s32.totalorder %s11, 5
    %p157 = pnand %p155, %p156
    %p158 = pneg %p157
    // Predicated region
    $region9: #{tpu_custom_call.1} parent=5 // pred_check
      _
    $region10: #{tpu_custom_call.1} parent=5 // pred_check_branch
      %160 = sbr.rel (%p157) target = $region12
    $region11: #{tpu_custom_call.1} parent=5 // pred_region
      %s161 = ssub.s32 %s11, 1
      // Predicated region
      $region13: #{tpu_custom_call.1} parent=11 // pred_check
        %p162 = pneg %p58
      $region14: #{tpu_custom_call.1} parent=11 // pred_check_branch
        %164 = sbr.rel (%p162) target = $region16
      $region15: #{tpu_custom_call.1} parent=11 // pred_region
        _
      $region16: #{tpu_custom_call.1} parent=11 // pred_fallthru
        _
      // Predicated region
      $region17: #{tpu_custom_call.1} parent=11 // pred_check
        %p165 = pneg %p79
      $region18: #{tpu_custom_call.1} parent=11 // pred_check_branch
        %167 = sbr.rel (%p165) target = $region20
      $region19: #{tpu_custom_call.1} parent=11 // pred_region
        _
      $region20: #{tpu_custom_call.1} parent=11 // pred_fallthru
        _
      // Predicated region
      $region21: #{tpu_custom_call.1} parent=11 // pred_check
        %p168 = pneg %p100
      $region22: #{tpu_custom_call.1} parent=11 // pred_check_branch
        %170 = sbr.rel (%p168) target = $region24
      $region23: #{tpu_custom_call.1} parent=11 // pred_region
        _
      $region24: #{tpu_custom_call.1} parent=11 // pred_fallthru
        _
      // Predicated region
      $region25: #{tpu_custom_call.1} parent=11 // pred_check
        %p171 = pneg %p121
      $region26: #{tpu_custom_call.1} parent=11 // pred_check_branch
        %173 = sbr.rel (%p171) target = $region28
      $region27: #{tpu_custom_call.1} parent=11 // pred_region
        _
      $region28: #{tpu_custom_call.1} parent=11 // pred_fallthru
        _
    $region12: #{tpu_custom_call.1} parent=5 // pred_fallthru
      _
    %p174 = scmp.lt.s32.totalorder %s11, 4
    // Predicated region
    $region29: #{tpu_custom_call.1} parent=5 // pred_check
      %p175 = pneg %p174
    $region30: #{tpu_custom_call.1} parent=5 // pred_check_branch
      %177 = sbr.rel (%p175) target = $region32
    $region31: #{tpu_custom_call.1} parent=5 // pred_region
      // Predicated region
      $region33: #{tpu_custom_call.1} parent=31 // pred_check
        %p178 = pneg %p31
      $region34: #{tpu_custom_call.1} parent=31 // pred_check_branch
        %180 = sbr.rel (%p178) target = $region36
      $region35: #{tpu_custom_call.1} parent=31 // pred_region
        %s181 = smul.u32 2, %s11
        %p182 = scmp.lt.s32.totalorder %s181, 7
        %s183 = scalar_select %p182, %s181, 7
        %s184 = smul.addr %s183, 8
        %s185 = scalar_lea.vmem %s0, %s184
        %s186 = smul.u32 2, %s11
      $region36: #{tpu_custom_call.1} parent=31 // pred_fallthru
        _
    $region32: #{tpu_custom_call.1} parent=5 // pred_fallthru
      _
    %p187 = scmp.le.s32.totalorder 1, %s11
    %p188 = scmp.lt.s32.totalorder %s11, 5
    %p189 = pnand %p187, %p188
    %p190 = pneg %p189
    // Predicated region
    $region37: #{tpu_custom_call.1} parent=5 // pred_check
      _
    $region38: #{tpu_custom_call.1} parent=5 // pred_check_branch
      %192 = sbr.rel (%p189) target = $region40
    $region39: #{tpu_custom_call.1} parent=5 // pred_region
      %s193 = ssub.s32 %s11, 1
      %s194 = smul.u32 2, %s16
      %p195 = scmp.lt.s32.totalorder %s194, 7
      %s196 = scalar_select %p195, %s194, 7
      %s197 = smul.addr %s196, 8
      %s198 = scalar_lea.vmem %s0, %s197
      %p199 = pneg %p37
      %p200 = pneg %p34
      %p201 = pneg %p58
      %p202 = pneg %p55
      %p203 = pneg %p79
      %p204 = pneg %p76
      %p205 = pneg %p100
      %p206 = pneg %p97
      %p207 = pneg %p121
      %p208 = pneg %p118
      %p209 = pneg %p147
      %p210 = pneg %p144
      %s211 = smul.u32 2, %s16
      %p212 = scmp.lt.s32.totalorder %s211, 7
      %s213 = scalar_select %p212, %s211, 7
      %s214 = smul.addr %s213, 8
      %s215 = scalar_lea.vmem %s5, %s214
      %s216 = smul.u32 2, %s16
      %p217 = scmp.lt.s32.totalorder %s216, 7
      %s218 = scalar_select %p217, %s216, 7
      %s219 = smul.addr %s218, 8
      %s220 = scalar_lea.vmem %s0, %s219
      %s221 = smul.u32 2, %s16
      %s222 = smul.u32 2, %s16
      %p223 = scmp.lt.s32.totalorder %s222, 7
      %s224 = scalar_select %p223, %s222, 7
      %s225 = smul.addr %s224, 8
      %s226 = scalar_lea.vmem %s5, %s225
      %s227 = smul.u32 2, %s16
      %v228 = vld [vmem:[%s220] sm:$0xff]
      %v229 = vld [vmem:[%s220 + $0x8] sm:$0xff]
      %v230 = vld [vmem:[%s1] sm:$0xff]
      %v231 = vld [vmem:[%s1 + $0x8] sm:$0xff]
      %v232 = vld [vmem:[%s1 + $0x10] sm:$0xff]
      %v233 = vld [vmem:[%s1 + $0x18] sm:$0xff]
      %v234 = vld [vmem:[%s2] sm:$0x1]
      %v236 = vlaneseq
      %v237 = vshrl.u32 %v236, 7
      %v238 = vsub.s32 0, %v237
      %v239 = vrot.slane %v234, %v238
      %vm241 = vcmask 261120
      %v243 = vsel %vm241, %v228, 0
      %v246 = vsel %vm241, %v229, 0
      %248 = vmatprep.subr.mxu0 0.0
      %249 = vmatpush1.msra.mxu0 %v230
      %250 = vmatprep.subr.mxu0 0.0
      %251 = vmatpush1.msra.mxu0 %v231
      %252 = vmatprep.subr.mxu0 0.0
      %253 = vmatpush1.msra.mxu0 %v232
      %254 = vmatprep.subr.mxu0 0.0
      %255 = vmatpush1.msra.mxu0 %v233
      %256 = vmatprep.subr.mxu0 0.0
      %257 = vmatpush1.msra.mxu0 0.0
      %258 = vmatprep.subr.mxu0 0.0
      %259 = vmatpush1.msra.mxu0 0.0
      %260 = vmatprep.subr.mxu0 0.0
      %261 = vmatpush1.msra.mxu0 0.0
      %262 = vmatprep.subr.mxu0 0.0
      %263 = vmatpush1.msra.mxu0 0.0
      %264 = vmatprep.subr.mxu0 0.0
      %265 = vmatpush1.msra.mxu0 0.0
      %266 = vmatprep.subr.mxu0 0.0
      %267 = vmatpush1.msra.mxu0 0.0
      %268 = vmatprep.subr.mxu0 0.0
      %269 = vmatpush1.msra.mxu0 0.0
      %270 = vmatprep.subr.mxu0 0.0
      %271 = vmatpush1.msra.mxu0 0.0
      %272 = vmatprep.subr.mxu0 0.0
      %273 = vmatpush1.msra.mxu0 0.0
      %274 = vmatprep.subr.mxu0 0.0
      %275 = vmatpush1.msra.mxu0 0.0
      %276 = vmatprep.subr.mxu0 0.0
      %277 = vmatpush1.msra.mxu0 0.0
      %278 = vmatprep.subr.mxu0 0.0
      %279 = vmatpush1.msra.mxu0 0.0
      %280 = vmatprep.subr.mxu0 0.0
      %281 = vmatpush1.msra.mxu0 0.0
      %282 = vmatprep.subr.mxu0 0.0
      %283 = vmatpush1.msra.mxu0 0.0
      %284 = vmatprep.subr.mxu0 0.0
      %285 = vmatpush1.msra.mxu0 0.0
      %286 = vmatprep.subr.mxu0 0.0
      %287 = vmatpush1.msra.mxu0 0.0
      %288 = vmatprep.subr.mxu0 0.0
      %289 = vmatpush1.msra.mxu0 0.0
      %290 = vmatprep.subr.mxu0 0.0
      %291 = vmatpush1.msra.mxu0 0.0
      %292 = vmatprep.subr.mxu0 0.0
      %293 = vmatpush1.msra.mxu0 0.0
      %294 = vmatprep.subr.mxu0 0.0
      %295 = vmatpush1.msra.mxu0 0.0
      %296 = vmatprep.subr.mxu0 0.0
      %297 = vmatpush1.msra.mxu0 0.0
      %298 = vmatprep.subr.mxu0 0.0
      %299 = vmatpush1.msra.mxu0 0.0
      %300 = vmatprep.subr.mxu0 0.0
      %301 = vmatpush1.msra.mxu0 0.0
      %302 = vmatprep.subr.mxu0 0.0
      %303 = vmatpush1.msra.mxu0 0.0
      %304 = vmatprep.subr.mxu0 0.0
      %305 = vmatpush1.msra.mxu0 0.0
      %306 = vmatprep.subr.mxu0 0.0
      %307 = vmatpush1.msra.mxu0 0.0
      %308 = vmatprep.subr.mxu0 0.0
      %309 = vmatpush1.msra.mxu0 0.0
      %310 = vmatprep.subr.mxu0 0.0
      %311 = vmatpush1.msra.mxu0 0.0
      %312 = vmatprep.mubr.f32.mxu0 0.0
      %313 = vmatmul.mubr.f32.gmra.mrb[0].mxu0 %v243
      %v314 = vpop.f32.mrb[0].mxu0
      %v315 = vadd.f32 %v239, %v314
      %v316 = vpop.f32.mrb[0].mxu0
      %317 = vmatprep.mubr.f32.mxu0 0.0
      %318 = vmatmul.mubr.f32.gmra.mrb[0].mxu0 %v246
      %v319 = vpop.f32.mrb[0].mxu0
      %v320 = vadd.f32 %v239, %v319
      %v321 = vpop.f32.mrb[0].mxu0
      %322 = vdwg.mxu0
      %v323 = vmax.f32 %v315, 0.0
      %v324 = vmax.f32 %v320, 0.0
      %v325 = vld [vmem:[%s3] sm:$0x3]
      %v326 = vld [vmem:[%s4] sm:$0x1]
      %v327 = vlaneseq
      %v328 = vshrl.u32 %v327, 7
      %v329 = vsub.s32 0, %v328
      %v330 = vrot.slane %v325, %v329
      %v331 = vmul.f32 %v323, %v330
      %v332 = vmul.f32 %v324, %v330
      %vm333 = vcmask 80896
      %v334 = vsel %vm333, %v331, 0.0
      %335 = vadd.xlane.f32.xlu0 %v334
      %v336 = vpop.xlane.xlu0 %335
      %v337 = vsel %vm333, %v332, 0.0
      %338 = vadd.xlane.f32.xlu0 %v337
      %v339 = vpop.xlane.xlu0 %338
      %v341 = vlaneseq
      %v342 = vshrl.u32 %v341, 7
      %v343 = vsub.s32 0, %v342
      %v344 = vrot.slane %v326, %v343
      %v346 = vadd.f32 %v336, %v344
      %v347 = vadd.f32 %v339, %v344
      %v348 = vlaneseq
      %v349 = vshrl.u32 %v348, 7
      %v350 = vsub.s32 1, %v349
      %v351 = vrot.slane %v325, %v350
      %v352 = vmul.f32 %v323, %v351
      %v353 = vmul.f32 %v324, %v351
      %v354 = vsel %vm333, %v352, 0.0
      %355 = vadd.xlane.f32.xlu0 %v354
      %v356 = vpop.xlane.xlu0 %355
      %v357 = vsel %vm333, %v353, 0.0
      %358 = vadd.xlane.f32.xlu0 %v357
      %v359 = vpop.xlane.xlu0 %358
      %v360 = vadd.f32 %v356, %v344
      %v361 = vadd.f32 %v359, %v344
      %364 = vrot.lane.b32.xlu0 %v346, 1
      %v365 = vpop.permute.xlu0 %364
      %366 = vrot.lane.b32.xlu0 %v347, 1
      %v367 = vpop.permute.xlu0 %366
      %v370 = vsub.f32 %v360, %v365
      %v371 = vsub.f32 %v361, %v367
      %v372 = vand.u32 2147483647, %v370
      %v373 = vand.u32 2147483647, %v371
      %v374 = vsub.f32 0.0, %v372
      %v375 = vsub.f32 0.0, %v373
      %v376 = vmul.f32 %v374, 1.442695
      %v377 = vpow.pop %v376
      %v378 = vmul.f32 %v375, 1.442695
      %v379 = vpow.pop %v378
      %v380 = vadd.f32 %v377, 1.0
      %v381 = vadd.f32 %v379, 1.0
      %v382 = vlog2.pop %v380
      %v383 = vmul.f32 %v382, 0.6931472
      %v384 = vlog2.pop %v381
      %v385 = vmul.f32 %v384, 0.6931472
      %v386 = vmax.f32 %v370, 0.0
      %v387 = vmax.f32 %v371, 0.0
      %v388 = vadd.f32 %v386, %v383
      %v389 = vadd.f32 %v387, %v385
      %v390 = vsub.f32 0.0, %v388
      %v391 = vsub.f32 0.0, %v389
      %v392 = vsub.f32 0.0, %v370
      %v393 = vsub.f32 0.0, %v371
      %v394 = vmax.f32 %v392, 0.0
      %v395 = vmax.f32 %v393, 0.0
      %v396 = vadd.f32 %v394, %v383
      %v397 = vadd.f32 %v395, %v385
      %v398 = vsub.f32 0.0, %v396
      %v399 = vsub.f32 0.0, %v397
      %402 = vrot.lane.b32.xlu0 %v390, 127
      %v403 = vpop.permute.xlu0 %402
      %404 = vrot.lane.b32.xlu0 %v391, 127
      %v405 = vpop.permute.xlu0 %404
      %vm408 = vcmask 7168
      %v409 = vsel %vm408, %v403, %v398
      %v410 = vsel %vm408, %v405, %v399
      %vm411 = vcmask 15360
      %412 = vst.msk [vmem:[%s226] sm:$0xff] %vm411, %v409
      %413 = vst.msk [vmem:[%s226 + $0x8] sm:$0xff] %vm411, %v410
      %s414 = smul.u32 2, %s16
      %p415 = scmp.lt.s32.totalorder %s414, 7
      %s416 = scalar_select %p415, %s414, 7
      %s417 = smul.addr %s416, 8
      %s418 = scalar_lea.vmem %s5, %s417
      // Predicated region
      $region41: #{tpu_custom_call.1} parent=39 // pred_check
        %p419 = pneg %p144
      $region42: #{tpu_custom_call.1} parent=39 // pred_check_branch
        %421 = sbr.rel (%p419) target = $region44
      $region43: #{tpu_custom_call.1} parent=39 // pred_region
        %s422 = smul.u32 2, %s16
      $region44: #{tpu_custom_call.1} parent=39 // pred_fallthru
        _
    $region40: #{tpu_custom_call.1} parent=5 // pred_fallthru
      _
    %p423 = scmp.le.s32.totalorder 2, %s11
    // Predicated region
    $region45: #{tpu_custom_call.1} parent=5 // pred_check
      %p424 = pneg %p423
    $region46: #{tpu_custom_call.1} parent=5 // pred_check_branch
      %426 = sbr.rel (%p424) target = $region48
    $region47: #{tpu_custom_call.1} parent=5 // pred_region
      %s427 = ssub.s32 %s11, 2
      // Predicated region
      $region49: #{tpu_custom_call.1} parent=47 // pred_check
        %p428 = pneg %p150
      $region50: #{tpu_custom_call.1} parent=47 // pred_check_branch
        %430 = sbr.rel (%p428) target = $region52
      $region51: #{tpu_custom_call.1} parent=47 // pred_region
        %s431 = smul.u32 2, %s17
        %p432 = scmp.lt.s32.totalorder %s431, 7
        %s433 = scalar_select %p432, %s431, 7
        %s434 = smul.addr %s433, 8
        %s435 = scalar_lea.vmem %s5, %s434
      $region52: #{tpu_custom_call.1} parent=47 // pred_fallthru
        _
    $region48: #{tpu_custom_call.1} parent=5 // pred_fallthru
      _
  $region6: #{tpu_custom_call.1} parent=0 // loop_footer
    %s15 = sadd.s32 1, %s11
  $region7: #{tpu_custom_call.1} parent=0 // loop_footer_branch
    %10 = sbr.rel target = $region3
  $region8: #{tpu_custom_call.1} parent=0 // loop_exit
    _

</llo_original>
